<compile_context>
chip_gen: v7x
topology: tpu7x:2x2x1
jax: 0.10.0
libtpu: 0.0.40
codegen_flags: <defaults>
</compile_context>

<pallas_src>
import functools

import jax
import jax.numpy as jnp
from jax.experimental import pallas as pl
from jax.experimental.pallas import tpu as pltpu


def _copy_tile_kernel(x_ref, o_ref):
    # Tiled path: pure tile copy — the chomp lives entirely in the BlockSpecs.
    o_ref[...] = x_ref[...]


def _slice_block_kernel(x_ref, o_ref, *, l_out):
    # Tiny-input path: whole slab in VMEM, static prefix slice along lanes.
    o_ref[...] = x_ref[...][:, :l_out]


def _round_up(x: int, m: int) -> int:
    return ((x + m - 1) // m) * m


def _sublane(dtype) -> int:
    # Sublane packing multiple for the second-to-last dim.
    return {4: 8, 2: 16, 1: 32}.get(jnp.dtype(dtype).itemsize, 8)


# Whole-slab (padded) byte threshold below which we use a single grid-less
# block instead of the tiled pipeline.
_SMALL_SLAB_BYTES = 512 * 1024
# Per-tile byte budget for the tiled path (2 in + 2 out double-buffered tiles
# = 32 MiB; fits under the explicit 48 MiB scoped-VMEM limit on all
# generations, incl. v7x's 64 MiB physical VMEM).
_TILE_BYTES = 8 * 1024 * 1024
_VMEM_LIMIT_BYTES = 48 * 1024 * 1024


@functools.partial(jax.jit, static_argnames=("chomp_size",))
def chomp1d(x, chomp_size: int):
    n, c, l = x.shape
    assert 0 < chomp_size < l, "chomp_size must be in (0, L)"
    l_out = l - chomp_size

    rows = n * c
    x2d = x.reshape(rows, l)  # free reshape (row-major contiguous)

    itemsize = jnp.dtype(x.dtype).itemsize
    sub = _sublane(x.dtype)

    padded_rows = _round_up(rows, sub)
    padded_bytes = padded_rows * itemsize * (
        _round_up(l, 128) + _round_up(l_out, 128)
    )

    if padded_bytes <= _SMALL_SLAB_BYTES:
        # ---- tiny-input path: single grid-less block, no per-step overhead.
        # Explicit VMEM memory space; block shape defaults to the full array,
        # so layout rules are trivially satisfied.
        out2d = pl.pallas_call(
            functools.partial(_slice_block_kernel, l_out=l_out),
            out_shape=jax.ShapeDtypeStruct((rows, l_out), x.dtype),
            in_specs=[pl.BlockSpec(memory_space=pltpu.MemorySpace.VMEM)],
            out_specs=pl.BlockSpec(memory_space=pltpu.MemorySpace.VMEM),
        )(x2d)
    else:
        # ---- tiled path: lane-dense, pure-DMA copy of the first l_out steps.
        elems_budget = _TILE_BYTES // itemsize
        full_tl = _round_up(l_out, 128)

        if sub * full_tl <= elems_budget:
            # Single lane tile spans the whole output row -> each output tile
            # is a fully contiguous HBM slab (unmasked, linear writeback DMA);
            # grid is effectively 1-D over rows.
            tl = full_tl
        else:
            # Very long sequences: 2-D tiling.  Balance the column tiles so
            # the last tile's over-read past l_out is bounded.
            max_tl = max(((elems_budget // sub) // 128) * 128, 128)
            n_col = pl.cdiv(full_tl, max_tl)
            tl = _round_up(pl.cdiv(l_out, n_col), 128)

        max_rows_per_tile = max(((elems_budget // tl) // sub) * sub, sub)
        if rows <= max_rows_per_tile:
            tr = rows  # == full dim, always layout-legal
        else:
            tr = max_rows_per_tile

        grid = (pl.cdiv(rows, tr), pl.cdiv(l_out, tl))

        # v7x megacore: guarantee >= 2 tiles along a parallel axis so the copy
        # actually shards across both TensorCores (harmless on v5e/v6e).
        if grid == (1, 1):
            if rows > sub:
                tr = _round_up(pl.cdiv(rows, 2), sub)
            elif l_out > 128:
                tl = _round_up(pl.cdiv(l_out, 2), 128)
            grid = (pl.cdiv(rows, tr), pl.cdiv(l_out, tl))

        out2d = pl.pallas_call(
            _copy_tile_kernel,
            out_shape=jax.ShapeDtypeStruct((rows, l_out), x.dtype),
            grid_spec=pltpu.PrefetchScalarGridSpec(
                num_scalar_prefetch=0,
                grid=grid,
                # Identical block shape + index_map for input and output:
                # block (i, j) covers rows [i*tr, ...) and time [j*tl, ...).
                # The grid only spans the first l_out time steps; the ragged
                # output edge is masked by Pallas on writeback.
                in_specs=[pl.BlockSpec((tr, tl), lambda i, j: (i, j))],
                out_specs=pl.BlockSpec((tr, tl), lambda i, j: (i, j)),
            ),
            compiler_params=pltpu.CompilerParams(
                # Every tile is an independent copy -> shard across both
                # TensorCores on v7x; harmless on v5e/v6e.
                dimension_semantics=("parallel", "parallel"),
                vmem_limit_bytes=_VMEM_LIMIT_BYTES,
            ),
        )(x2d)

    return out2d.reshape(n, c, l_out)


if __name__ == "__main__":
    key = jax.random.PRNGKey(0)

    # Small NCL input consistent with a TCN layer: batch=2, channels=4, len=16
    # (exercises the grid-less tiny path).
    x_small = jax.random.normal(key, (2, 4, 16), dtype=jnp.float32)
    chomp_small = 3
    out_small = jax.block_until_ready(chomp1d(x_small, chomp_small))
    ref_small = x_small[:, :, :-chomp_small]
    assert out_small.shape == ref_small.shape, (out_small.shape, ref_small.shape)
    assert jnp.array_equal(out_small, ref_small), "tiny-path mismatch vs reference"

    # Modest slab (~0.5 MiB) that exercises the tiled grid path, the
    # full-width lane tile, and the two-TensorCore row split.
    x_tiled = jax.random.normal(key, (2, 32, 2100), dtype=jnp.float32)
    chomp_tiled = 52
    out_tiled = jax.block_until_ready(chomp1d(x_tiled, chomp_tiled))
    ref_tiled = x_tiled[:, :, :-chomp_tiled]
    assert out_tiled.shape == ref_tiled.shape, (out_tiled.shape, ref_tiled.shape)
    assert jnp.array_equal(out_tiled, ref_tiled), "tiled-path mismatch vs reference"

    print("KERNEL_OK")
</pallas_src>

<mosaic_0001>
module attributes {stable_mosaic.version = 11 : i64} {
  func.func @_slice_block_kernel(%arg0: memref<8x16xf32, #tpu.memory_space<vmem>>, %arg1: memref<8x13xf32, #tpu.memory_space<vmem>>) attributes {dimension_semantics = [], scalar_prefetch = 0 : i64, scratch_operands = 0 : i64, tpu.core_type = #tpu.core_type<tc>} {
    %c0 = arith.constant 0 : index
    %c0_0 = arith.constant 0 : index
    %0 = vector.load %arg0[%c0, %c0_0] : memref<8x16xf32, #tpu.memory_space<vmem>>, vector<8x16xf32>
    %1 = vector.extract_strided_slice %0 {offsets = [0, 0], sizes = [8, 13], strides = [1, 1]} : vector<8x16xf32> to vector<8x13xf32>
    %c0_1 = arith.constant 0 : index
    %c0_2 = arith.constant 0 : index
    %2 = vector.load %arg1[%c0_1, %c0_2] : memref<8x13xf32, #tpu.memory_space<vmem>>, vector<8x13xf32>
    tpu.vector_store %arg1[%c0_1, %c0_2], %1 {strides = array<i32>} : memref<8x13xf32, #tpu.memory_space<vmem>>, vector<8x13xf32>,
    return
  }
}

</mosaic_0001>

<llo_original>
// kernel: chomp1d.1
$region0: #{chomp1d.1}
  #allocation0 [shape = 'u32[]', space=smem, size = 0x4, offset = 0x4, fixed_abs, tag = 'smem constant byte address 0x4 - core index']
  #allocation1 [shape = 'u32[144,128]{1,0:T(1,128)}', space=vmem, size = 0x12000, scoped, tag = 'internal scratch']
  %s0 = inlined_call_operand.hbm [shape: f32[8,16], index: 0, kind: input, shape index: {}]
  %s1 = inlined_call_operand.hbm [shape: f32[8,13], index: 1, kind: output, shape index: {}]
  %s2 = sld [smem:[#allocation0]]
  $region18: #{chomp1d.1} parent=0
    _
  %s4 = ssub.s32 1, %s2
  %s5 = scalar_select 0, %s4, %s2
  $region1: #{chomp1d.1} parent=0
    #allocation2 [shape = 'u8[4096]{0}', space=vmem, size = 0x1000, scoped, tag = 'input window, operand 0, single buffered']
    #allocation3 [shape = 's32[1]{0}', space=sflag, size = 0x4, scoped, tag = 'scoped memory for chomp1d.1']
    #allocation4 [shape = 's32[1]{0}', space=sflag, size = 0x4, scoped, tag = 'scoped memory for chomp1d.1']
    #allocation5 [shape = 'u8[4096]{0}', space=vmem, size = 0x1000, scoped, tag = 'output window, operand 0, single buffered']
    %6 = vsyncpa [#allocation3], 0
    %7 = vsyncpa [#allocation4], 0
    // Predicated region
    $region2: #{chomp1d.1} parent=1 // pred_check
      _
    $region3: #{chomp1d.1} parent=1 // pred_check_branch
      %9 = sbr.rel (0) target = $region5
    $region4: #{chomp1d.1} parent=1 // pred_region
      %s11 = ssub.s32 128, 128
      %12 = vsyncadd [#allocation3], %s11
      %s14 = sshll.u32 [#allocation2], 4
      %s15 = int_to_ptr.vmem [resolvable:$true] %s14
      %17 = dma.hbm_to_vmem [thread:$0]  %s0, 128, %s15, [#allocation3]
    $region5: #{chomp1d.1} parent=1 // pred_fallthru
      _
    // Predicated region
    $region6: #{chomp1d.1} parent=1 // pred_check
      _
    $region7: #{chomp1d.1} parent=1 // pred_check_branch
      %19 = sbr.rel (0) target = $region9
    $region8: #{chomp1d.1} parent=1 // pred_region
      %20 = dma.done [#allocation3], 128
    $region9: #{chomp1d.1} parent=1 // pred_fallthru
      _
    %v21 = vld [vmem:[#allocation2] sm:$0xff]
    %vm22 = vcmask 105472
    %23 = vst.msk [vmem:[#allocation5] sm:$0xff] %vm22, %v21
    // Predicated region
    $region10: #{chomp1d.1} parent=1 // pred_check
      _
    $region11: #{chomp1d.1} parent=1 // pred_check_branch
      %25 = sbr.rel (0) target = $region13
    $region12: #{chomp1d.1} parent=1 // pred_region
      %s27 = ssub.s32 128, 128
      %28 = vsyncadd [#allocation4], %s27
      %s30 = sshll.u32 [#allocation5], 4
      %s31 = int_to_ptr.vmem [resolvable:$true] %s30
      %33 = dma.vmem_to_hbm [thread:$0]  %s31, 128, %s1, [#allocation4]
    $region13: #{chomp1d.1} parent=1 // pred_fallthru
      _
    // Predicated region
    $region14: #{chomp1d.1} parent=1 // pred_check
      _
    $region15: #{chomp1d.1} parent=1 // pred_check_branch
      %35 = sbr.rel (0) target = $region17
    $region16: #{chomp1d.1} parent=1 // pred_region
      %36 = dma.done [#allocation4], 128
    $region17: #{chomp1d.1} parent=1 // pred_fallthru
      _
    %37 = vsyncpa [#allocation3], 1
    %38 = vsyncpa [#allocation4], 1

</llo_original>
